<compile_context>
chip_gen: v6e
topology: v6e:2x2x1
jax: 0.10.0
libtpu: 0.0.40
codegen_flags: <defaults>
</compile_context>

<pallas_src>
from functools import partial

import jax
import jax.numpy as jnp
from jax import lax
from jax.experimental import pallas as pl
from jax.experimental.pallas import tpu as pltpu


def actor_discrete_kernel(
    x_ref,
    w1_ref, b1_ref,
    w2_ref, b2_ref,
    w3_ref, b3_ref,
    w4_ref, b4_ref,
    w5d_ref, b5d_ref,
    out_ref,
):
    """One (tb, Din) tile of rows through the 5-layer MLP + 2-class softmax."""
    cd = w1_ref.dtype          # compute dtype at the MXU inputs (bf16 or f32)
    f32 = jnp.float32

    x = x_ref[...]

    # fc1..fc4: MXU dots with f32 accumulation; bias + ReLU on the f32 VPU path.
    h = jnp.dot(x, w1_ref[...], preferred_element_type=f32) + b1_ref[...]
    h = jnp.maximum(h, 0.0)

    h = jnp.dot(h.astype(cd), w2_ref[...], preferred_element_type=f32) + b2_ref[...]
    h = jnp.maximum(h, 0.0)

    h = jnp.dot(h.astype(cd), w3_ref[...], preferred_element_type=f32) + b3_ref[...]
    h = jnp.maximum(h, 0.0)

    h = jnp.dot(h.astype(cd), w4_ref[...], preferred_element_type=f32) + b4_ref[...]
    h = jnp.maximum(h, 0.0)

    # fc5 folded to the logit difference d = logit1 - logit0, produced directly
    # in lane-dense (1, tb) row form via the attention-style contraction
    # (lhs (1, 256) . rhs (tb, 256) contracting dim 1 of both == q @ k^T).
    d = lax.dot_general(
        w5d_ref[...], h.astype(cd),
        dimension_numbers=(((1,), (1,)), ((), ())),
        preferred_element_type=f32,
    ) + b5d_ref[...]                               # (1, tb), f32

    # softmax over 2 classes == numerically-stable sigmoid of the logit diff.
    # All operands are (1, tb) dense rows (no cross-lane reductions needed).
    e = jnp.exp(-jnp.abs(d))                       # EUP
    inv = 1.0 / (1.0 + e)                          # exact divide (keeps 1e-5 tol)
    ei = e * inv
    ge = d >= 0.0
    p1 = jnp.where(ge, inv, ei)                    # == sigmoid(d)  == P(action 1)
    p0 = jnp.where(ge, ei, inv)                    # == sigmoid(-d) == P(action 0)

    out_ref[0:1, :] = p0.astype(out_ref.dtype)
    out_ref[1:2, :] = p1.astype(out_ref.dtype)


def _round_up(x, m):
    return ((x + m - 1) // m) * m


def _choose_batch_tile(b, block_b):
    """Pick the batch tile (rows per grid step)."""
    if b < 256:
        # Single tile; round to 16 rows (native bf16 (16,128) sublane pairing).
        return _round_up(b, 16)
    # Large batches: ~block_b rows per tile, but keep an even number of grid
    # steps (>=2) so the "parallel" batch axis can split across both
    # TensorCores on v7x; tile rounded to 128 so the lane-dense (2, tb) output
    # block keeps unmasked stores when the grid has >1 step.
    n = max(2, pl.cdiv(b, block_b))
    n += n % 2
    return _round_up(pl.cdiv(b, n), 128)


def prepare_params(params, compute_dtype=jnp.bfloat16):
    """One-time param prep (outside the per-call RL inner loop).

    Weights -> [in, out] in compute_dtype; biases -> (1, H) f32 rows; fc5 is
    folded to a single logit-difference column w5d (1, 256) + scalar b5d (1, 1).
    bf16 dot inputs are fine on v5e/v6e/v7x (full-rate MXU); accumulation and
    all elementwise math stay f32 in the kernel.
    """
    (w1, b1), (w2, b2), (w3, b3), (w4, b4), (w5, b5) = params
    cd = compute_dtype
    prep_w = lambda w: jnp.asarray(w, jnp.float32).astype(cd)
    prep_b = lambda bb: jnp.asarray(bb, jnp.float32).reshape(1, -1)
    w5d = (w5[:, 1] - w5[:, 0]).astype(jnp.float32).reshape(1, -1).astype(cd)
    b5d = jnp.asarray(b5[1] - b5[0], jnp.float32).reshape(1, 1)
    return (prep_w(w1), prep_b(b1),
            prep_w(w2), prep_b(b2),
            prep_w(w3), prep_b(b3),
            prep_w(w4), prep_b(b4),
            w5d, b5d)


@partial(jax.jit, static_argnames=("block_b",))
def actor_discrete_forward(state, item, prepared_params, block_b=512):
    """ActorDiscrete.forward(state, item) -> action probabilities (B, 2)."""
    w1, b1, w2, b2, w3, b3, w4, b4, w5d, b5d = prepared_params

    # Concat once in the wrapper; fc1 becomes one K = Ds + Di dot.
    x = jnp.concatenate((state, item), axis=-1).astype(w1.dtype)
    b = x.shape[0]
    din = x.shape[-1]

    tb = _choose_batch_tile(b, block_b)
    padded_b = _round_up(b, tb)
    if padded_b != b:
        x = jnp.pad(x, ((0, padded_b - b), (0, 0)))

    batch_map = lambda i: (i, 0)      # activation tiles: batch block i
    resident_map = lambda i: (0, 0)   # weights / biases: same block every step

    param_args = (w1, b1, w2, b2, w3, b3, w4, b4, w5d, b5d)
    in_specs = [pl.BlockSpec((tb, din), batch_map)]
    in_specs += [pl.BlockSpec(p.shape, resident_map) for p in param_args]

    # Kernel emits a lane-dense (2, padded_b) slab (actions on sublanes, batch
    # on lanes); sliced / transposed back to (B, 2) here in the jitted wrapper.
    out_t = pl.pallas_call(
        actor_discrete_kernel,
        out_shape=jax.ShapeDtypeStruct((2, padded_b), jnp.float32),
        grid_spec=pltpu.PrefetchScalarGridSpec(
            num_scalar_prefetch=0,
            grid=(padded_b // tb,),
            in_specs=in_specs,
            out_specs=pl.BlockSpec((2, tb), lambda i: (0, i)),
        ),
        compiler_params=pltpu.CompilerParams(
            dimension_semantics=("parallel",),
        ),
    )(x, *param_args)

    return out_t[:, :b].T


def init_params(key, hidden_size, state_item_join_size):
    """Deterministic synthetic parameters. Weights stored as [in, out]."""
    dims = [
        (state_item_join_size, hidden_size),   # fc1
        (hidden_size, hidden_size),            # fc2
        (hidden_size, hidden_size // 2),       # fc3
        (hidden_size // 2, 256),               # fc4
        (256, 2),                              # fc5
    ]
    params = []
    for (fan_in, fan_out) in dims:
        key, kw, kb = jax.random.split(key, 3)
        bound = 1.0 / jnp.sqrt(fan_in)
        w = jax.random.uniform(kw, (fan_in, fan_out), jnp.float32, -bound, bound)
        bb = jax.random.uniform(kb, (fan_out,), jnp.float32, -bound, bound)
        params.append((w, bb))
    return params


def reference_forward(state, item, params):
    """Plain-JAX reference mirroring the PyTorch forward."""
    x = jnp.concatenate((state, item), axis=-1)
    (w1, b1), (w2, b2), (w3, b3), (w4, b4), (w5, b5) = params
    x = jnp.maximum(x @ w1 + b1, 0.0)
    x = jnp.maximum(x @ w2 + b2, 0.0)
    x = jnp.maximum(x @ w3 + b3, 0.0)
    x = jnp.maximum(x @ w4 + b4, 0.0)
    x = x @ w5 + b5
    return jax.nn.softmax(x, axis=-1)


if __name__ == "__main__":
    hidden_size = 32
    state_size = 16
    item_size = 8
    state_item_join_size = state_size + item_size

    key = jax.random.PRNGKey(0)
    k_params, k_state, k_item, k_state2, k_item2 = jax.random.split(key, 5)

    params = init_params(k_params, hidden_size, state_item_join_size)
    prepped_f32 = prepare_params(params, jnp.float32)     # tight-tolerance path
    prepped_bf16 = prepare_params(params, jnp.bfloat16)   # default / fast path

    # Small-shape check (batch=2, padded to a single 16-row tile).
    state = jax.random.normal(k_state, (2, state_size), jnp.float32)
    item = jax.random.normal(k_item, (2, item_size), jnp.float32)
    probs = jax.block_until_ready(actor_discrete_forward(state, item, prepped_f32))
    ref = reference_forward(state, item, params)
    assert probs.shape == (2, 2)
    assert jnp.allclose(probs, ref, atol=1e-5, rtol=1e-5), (probs, ref)
    assert jnp.allclose(jnp.sum(probs, axis=-1), 1.0, atol=1e-5)

    # Larger ragged batch exercises the multi-step grid (2 tiles of 256) +
    # padding + the lane-dense (2, tb) output blocks.
    state2 = jax.random.normal(k_state2, (300, state_size), jnp.float32)
    item2 = jax.random.normal(k_item2, (300, item_size), jnp.float32)
    probs2 = jax.block_until_ready(actor_discrete_forward(state2, item2, prepped_f32))
    ref2 = reference_forward(state2, item2, params)
    assert probs2.shape == (300, 2)
    assert jnp.allclose(probs2, ref2, atol=1e-5, rtol=1e-5)
    assert jnp.allclose(jnp.sum(probs2, axis=-1), 1.0, atol=1e-5)

    # bf16 (default) compute path; loose tolerance vs the f32 reference.
    probs_bf16 = jax.block_until_ready(
        actor_discrete_forward(state2, item2, prepped_bf16))
    assert probs_bf16.shape == (300, 2)
    assert float(jnp.max(jnp.abs(probs_bf16 - ref2))) < 0.1

    print("KERNEL_OK")
</pallas_src>

<mosaic_0001>
module attributes {stable_mosaic.version = 11 : i64} {
  func.func @actor_discrete_kernel(%arg0: i32, %arg1: memref<16x24xf32, #tpu.memory_space<vmem>>, %arg2: memref<24x32xf32, #tpu.memory_space<vmem>>, %arg3: memref<1x32xf32, #tpu.memory_space<vmem>>, %arg4: memref<32x32xf32, #tpu.memory_space<vmem>>, %arg5: memref<1x32xf32, #tpu.memory_space<vmem>>, %arg6: memref<32x16xf32, #tpu.memory_space<vmem>>, %arg7: memref<1x16xf32, #tpu.memory_space<vmem>>, %arg8: memref<16x256xf32, #tpu.memory_space<vmem>>, %arg9: memref<1x256xf32, #tpu.memory_space<vmem>>, %arg10: memref<1x256xf32, #tpu.memory_space<vmem>>, %arg11: memref<1x1xf32, #tpu.memory_space<vmem>>, %arg12: memref<2x16xf32, #tpu.memory_space<vmem>>) attributes {dimension_semantics = [#tpu.dimension_semantics<parallel>], iteration_bounds = array<i64: 1>, scalar_prefetch = 0 : i64, scratch_operands = 0 : i64, tpu.core_type = #tpu.core_type<tc>, window_params = [{transform_indices = @transform_0, window_bounds = array<i64: 16, 24>}, {pipeline_mode = #tpu.pipeline_mode<synchronous>, transform_indices = @transform_1, window_bounds = array<i64: 24, 32>}, {pipeline_mode = #tpu.pipeline_mode<synchronous>, transform_indices = @transform_2, window_bounds = array<i64: 1, 32>}, {pipeline_mode = #tpu.pipeline_mode<synchronous>, transform_indices = @transform_3, window_bounds = array<i64: 32, 32>}, {pipeline_mode = #tpu.pipeline_mode<synchronous>, transform_indices = @transform_4, window_bounds = array<i64: 1, 32>}, {pipeline_mode = #tpu.pipeline_mode<synchronous>, transform_indices = @transform_5, window_bounds = array<i64: 32, 16>}, {pipeline_mode = #tpu.pipeline_mode<synchronous>, transform_indices = @transform_6, window_bounds = array<i64: 1, 16>}, {pipeline_mode = #tpu.pipeline_mode<synchronous>, transform_indices = @transform_7, window_bounds = array<i64: 16, 256>}, {pipeline_mode = #tpu.pipeline_mode<synchronous>, transform_indices = @transform_8, window_bounds = array<i64: 1, 256>}, {pipeline_mode = #tpu.pipeline_mode<synchronous>, transform_indices = @transform_9, window_bounds = array<i64: 1, 256>}, {pipeline_mode = #tpu.pipeline_mode<synchronous>, transform_indices = @transform_10, window_bounds = array<i64: 1, 1>}, {transform_indices = @transform_11, window_bounds = array<i64: 2, 16>}]} {
    %c0 = arith.constant 0 : index
    %c0_0 = arith.constant 0 : index
    %0 = vector.load %arg1[%c0, %c0_0] : memref<16x24xf32, #tpu.memory_space<vmem>>, vector<16x24xf32>
    %c0_1 = arith.constant 0 : index
    %c0_2 = arith.constant 0 : index
    %1 = vector.load %arg2[%c0_1, %c0_2] : memref<24x32xf32, #tpu.memory_space<vmem>>, vector<24x32xf32>
    %cst = arith.constant dense<0.000000e+00> : vector<16x32xf32>
    %2 = tpu.matmul %0, %1, %cst {dimension_numbers = #tpu.dot_dimension_numbers<[1], [0], [0], [1], [0, 0, 1, 1], [], []>} : vector<16x24xf32>, vector<24x32xf32>, vector<16x32xf32> -> vector<16x32xf32>
    %c0_3 = arith.constant 0 : index
    %c0_4 = arith.constant 0 : index
    %3 = vector.load %arg3[%c0_3, %c0_4] : memref<1x32xf32, #tpu.memory_space<vmem>>, vector<1x32xf32>
    %4 = vector.broadcast %3 : vector<1x32xf32> to vector<16x32xf32>
    %5 = arith.addf %2, %4 : vector<16x32xf32>
    %cst_5 = arith.constant 0.000000e+00 : f32
    %6 = vector.broadcast %cst_5 : f32 to vector<16x32xf32>
    %7 = arith.maximumf %5, %6 : vector<16x32xf32>
    %c0_6 = arith.constant 0 : index
    %c0_7 = arith.constant 0 : index
    %8 = vector.load %arg4[%c0_6, %c0_7] : memref<32x32xf32, #tpu.memory_space<vmem>>, vector<32x32xf32>
    %cst_8 = arith.constant dense<0.000000e+00> : vector<16x32xf32>
    %9 = tpu.matmul %7, %8, %cst_8 {dimension_numbers = #tpu.dot_dimension_numbers<[1], [0], [0], [1], [0, 0, 1, 1], [], []>} : vector<16x32xf32>, vector<32x32xf32>, vector<16x32xf32> -> vector<16x32xf32>
    %c0_9 = arith.constant 0 : index
    %c0_10 = arith.constant 0 : index
    %10 = vector.load %arg5[%c0_9, %c0_10] : memref<1x32xf32, #tpu.memory_space<vmem>>, vector<1x32xf32>
    %11 = vector.broadcast %10 : vector<1x32xf32> to vector<16x32xf32>
    %12 = arith.addf %9, %11 : vector<16x32xf32>
    %cst_11 = arith.constant 0.000000e+00 : f32
    %13 = vector.broadcast %cst_11 : f32 to vector<16x32xf32>
    %14 = arith.maximumf %12, %13 : vector<16x32xf32>
    %c0_12 = arith.constant 0 : index
    %c0_13 = arith.constant 0 : index
    %15 = vector.load %arg6[%c0_12, %c0_13] : memref<32x16xf32, #tpu.memory_space<vmem>>, vector<32x16xf32>
    %cst_14 = arith.constant dense<0.000000e+00> : vector<16x16xf32>
    %16 = tpu.matmul %14, %15, %cst_14 {dimension_numbers = #tpu.dot_dimension_numbers<[1], [0], [0], [1], [0, 0, 1, 1], [], []>} : vector<16x32xf32>, vector<32x16xf32>, vector<16x16xf32> -> vector<16x16xf32>
    %c0_15 = arith.constant 0 : index
    %c0_16 = arith.constant 0 : index
    %17 = vector.load %arg7[%c0_15, %c0_16] : memref<1x16xf32, #tpu.memory_space<vmem>>, vector<1x16xf32>
    %18 = vector.broadcast %17 : vector<1x16xf32> to vector<16x16xf32>
    %19 = arith.addf %16, %18 : vector<16x16xf32>
    %cst_17 = arith.constant 0.000000e+00 : f32
    %20 = vector.broadcast %cst_17 : f32 to vector<16x16xf32>
    %21 = arith.maximumf %19, %20 : vector<16x16xf32>
    %c0_18 = arith.constant 0 : index
    %c0_19 = arith.constant 0 : index
    %22 = vector.load %arg8[%c0_18, %c0_19] : memref<16x256xf32, #tpu.memory_space<vmem>>, vector<16x256xf32>
    %cst_20 = arith.constant dense<0.000000e+00> : vector<16x256xf32>
    %23 = tpu.matmul %21, %22, %cst_20 {dimension_numbers = #tpu.dot_dimension_numbers<[1], [0], [0], [1], [0, 0, 1, 1], [], []>} : vector<16x16xf32>, vector<16x256xf32>, vector<16x256xf32> -> vector<16x256xf32>
    %c0_21 = arith.constant 0 : index
    %c0_22 = arith.constant 0 : index
    %24 = vector.load %arg9[%c0_21, %c0_22] : memref<1x256xf32, #tpu.memory_space<vmem>>, vector<1x256xf32>
    %25 = vector.broadcast %24 : vector<1x256xf32> to vector<16x256xf32>
    %26 = arith.addf %23, %25 : vector<16x256xf32>
    %cst_23 = arith.constant 0.000000e+00 : f32
    %27 = vector.broadcast %cst_23 : f32 to vector<16x256xf32>
    %28 = arith.maximumf %26, %27 : vector<16x256xf32>
    %c0_24 = arith.constant 0 : index
    %c0_25 = arith.constant 0 : index
    %29 = vector.load %arg10[%c0_24, %c0_25] : memref<1x256xf32, #tpu.memory_space<vmem>>, vector<1x256xf32>
    %cst_26 = arith.constant dense<0.000000e+00> : vector<1x16xf32>
    %30 = tpu.matmul %29, %28, %cst_26 {dimension_numbers = #tpu.dot_dimension_numbers<[1], [1], [0], [0], [0, 0, 1, 0], [], []>} : vector<1x256xf32>, vector<16x256xf32>, vector<1x16xf32> -> vector<1x16xf32>
    %c0_27 = arith.constant 0 : index
    %c0_28 = arith.constant 0 : index
    %31 = vector.load %arg11[%c0_27, %c0_28] : memref<1x1xf32, #tpu.memory_space<vmem>>, vector<1x1xf32>
    %32 = vector.broadcast %31 : vector<1x1xf32> to vector<1x16xf32>
    %33 = arith.addf %30, %32 : vector<1x16xf32>
    %34 = math.absf %33 : vector<1x16xf32>
    %cst_29 = arith.constant 0.000000e+00 : f32
    %35 = vector.broadcast %cst_29 : f32 to vector<1x16xf32>
    %36 = arith.subf %35, %34 : vector<1x16xf32>
    %37 = math.exp %36 : vector<1x16xf32>
    %cst_30 = arith.constant 1.000000e+00 : f32
    %38 = vector.broadcast %cst_30 : f32 to vector<1x16xf32>
    %39 = arith.addf %38, %37 : vector<1x16xf32>
    %cst_31 = arith.constant 1.000000e+00 : f32
    %40 = vector.broadcast %cst_31 : f32 to vector<1x16xf32>
    %41 = arith.divf %40, %39 : vector<1x16xf32>
    %42 = arith.mulf %37, %41 : vector<1x16xf32>
    %cst_32 = arith.constant 0.000000e+00 : f32
    %43 = vector.broadcast %cst_32 : f32 to vector<1x16xf32>
    %44 = arith.cmpf oge, %33, %43 : vector<1x16xf32>
    %45 = arith.select %44, %41, %42 : vector<1x16xi1>, vector<1x16xf32>
    %46 = arith.select %44, %42, %41 : vector<1x16xi1>, vector<1x16xf32>
    %c0_33 = arith.constant 0 : index
    %c0_34 = arith.constant 0 : index
    %47 = vector.load %arg12[%c0_33, %c0_34] : memref<2x16xf32, #tpu.memory_space<vmem>>, vector<1x16xf32>
    tpu.vector_store %arg12[%c0_33, %c0_34], %46 {strides = array<i32>} : memref<2x16xf32, #tpu.memory_space<vmem>>, vector<1x16xf32>,
    %c1 = arith.constant 1 : index
    %c0_35 = arith.constant 0 : index
    %48 = vector.load %arg12[%c1, %c0_35] : memref<2x16xf32, #tpu.memory_space<vmem>>, vector<1x16xf32>
    tpu.vector_store %arg12[%c1, %c0_35], %45 {strides = array<i32>} : memref<2x16xf32, #tpu.memory_space<vmem>>, vector<1x16xf32>,
    return
  }
  func.func @transform_0(%arg0: i32) -> (i32, i32) {
    %c0_i32 = arith.constant 0 : i32
    %c0_i32_0 = arith.constant 0 : i32
    return %arg0, %c0_i32 : i32, i32
  }
  func.func @transform_1(%arg0: i32) -> (i32, i32) {
    %c0_i32 = arith.constant 0 : i32
    %c0_i32_0 = arith.constant 0 : i32
    %c0_i32_1 = arith.constant 0 : i32
    return %c0_i32, %c0_i32_0 : i32, i32
  }
  func.func @transform_2(%arg0: i32) -> (i32, i32) {
    %c0_i32 = arith.constant 0 : i32
    %c0_i32_0 = arith.constant 0 : i32
    %c0_i32_1 = arith.constant 0 : i32
    return %c0_i32, %c0_i32_0 : i32, i32
  }
  func.func @transform_3(%arg0: i32) -> (i32, i32) {
    %c0_i32 = arith.constant 0 : i32
    %c0_i32_0 = arith.constant 0 : i32
    %c0_i32_1 = arith.constant 0 : i32
    return %c0_i32, %c0_i32_0 : i32, i32
  }
  func.func @transform_4(%arg0: i32) -> (i32, i32) {
    %c0_i32 = arith.constant 0 : i32
    %c0_i32_0 = arith.constant 0 : i32
    %c0_i32_1 = arith.constant 0 : i32
    return %c0_i32, %c0_i32_0 : i32, i32
  }
  func.func @transform_5(%arg0: i32) -> (i32, i32) {
    %c0_i32 = arith.constant 0 : i32
    %c0_i32_0 = arith.constant 0 : i32
    %c0_i32_1 = arith.constant 0 : i32
    return %c0_i32, %c0_i32_0 : i32, i32
  }
  func.func @transform_6(%arg0: i32) -> (i32, i32) {
    %c0_i32 = arith.constant 0 : i32
    %c0_i32_0 = arith.constant 0 : i32
    %c0_i32_1 = arith.constant 0 : i32
    return %c0_i32, %c0_i32_0 : i32, i32
  }
  func.func @transform_7(%arg0: i32) -> (i32, i32) {
    %c0_i32 = arith.constant 0 : i32
    %c0_i32_0 = arith.constant 0 : i32
    %c0_i32_1 = arith.constant 0 : i32
    return %c0_i32, %c0_i32_0 : i32, i32
  }
  func.func @transform_8(%arg0: i32) -> (i32, i32) {
    %c0_i32 = arith.constant 0 : i32
    %c0_i32_0 = arith.constant 0 : i32
    %c0_i32_1 = arith.constant 0 : i32
    return %c0_i32, %c0_i32_0 : i32, i32
  }
  func.func @transform_9(%arg0: i32) -> (i32, i32) {
    %c0_i32 = arith.constant 0 : i32
    %c0_i32_0 = arith.constant 0 : i32
    %c0_i32_1 = arith.constant 0 : i32
    return %c0_i32, %c0_i32_0 : i32, i32
  }
  func.func @transform_10(%arg0: i32) -> (i32, i32) {
    %c0_i32 = arith.constant 0 : i32
    %c0_i32_0 = arith.constant 0 : i32
    %c0_i32_1 = arith.constant 0 : i32
    return %c0_i32, %c0_i32_0 : i32, i32
  }
  func.func @transform_11(%arg0: i32) -> (i32, i32) {
    %c0_i32 = arith.constant 0 : i32
    %c0_i32_0 = arith.constant 0 : i32
    return %c0_i32, %arg0 : i32, i32
  }
}

</mosaic_0001>

<llo_original>
// kernel: actor_discrete_forward.1
$region0: #{actor_discrete_forward.1}
  #allocation0 [shape = 'u32[]', space=smem, size = 0x4, offset = 0x4, fixed_abs, tag = 'smem constant byte address 0x4 - core index']
  #allocation1 [shape = 'u32[144,128]{1,0:T(1,128)}', space=vmem, size = 0x12000, scoped, tag = 'internal scratch']
  #allocation2 [shape = 'f32[1,1]{1,0:T(1,128)S(1)}', space=vmem, size = 0x200, scoped, tag = 'scoped memory for actor_discrete_forward.1']
  %s0 = inlined_call_operand.vmem [shape: f32[16,24], index: 0, kind: input, shape index: {}]
  %s1 = inlined_call_operand.hbm [shape: f32[24,32], index: 1, kind: input, shape index: {}]
  %s2 = inlined_call_operand.hbm [shape: f32[1,32], index: 2, kind: input, shape index: {}]
  %s3 = inlined_call_operand.vmem [shape: f32[32,32], index: 3, kind: input, shape index: {}]
  %s4 = inlined_call_operand.hbm [shape: f32[1,32], index: 4, kind: input, shape index: {}]
  %s5 = inlined_call_operand.vmem [shape: f32[32,16], index: 5, kind: input, shape index: {}]
  %s6 = inlined_call_operand.hbm [shape: f32[1,16], index: 6, kind: input, shape index: {}]
  %s7 = inlined_call_operand.vmem [shape: f32[16,256], index: 7, kind: input, shape index: {}]
  %s8 = inlined_call_operand.vmem [shape: f32[1,256], index: 8, kind: input, shape index: {}]
  %s9 = inlined_call_operand.vmem [shape: f32[1,256], index: 9, kind: input, shape index: {}]
  %s10 = inlined_call_operand.<no memory space> [shape: f32[1,1], index: 10, kind: input, shape index: {}]
  %s11 = inlined_call_operand.vmem [shape: f32[2,16], index: 11, kind: output, shape index: {}]
  %s12 = sld [smem:[#allocation0]]
  $region70: #{actor_discrete_forward.1} parent=0
    _
  %s14 = ssub.s32 1, %s12
  %s15 = scalar_select 0, %s14, %s12
  %v16 = vstv %s10
  %17 = vst [vmem:[#allocation2] sm:$0x1] %v16
  $region1: #{actor_discrete_forward.1} parent=0
    #allocation3 [shape = 'u8[12288]{0}', space=vmem, size = 0x3000, scoped, tag = 'input window, operand 1, single buffered']
    #allocation4 [shape = 's32[1]{0}', space=sflag, size = 0x4, scoped, tag = 'scoped memory for actor_discrete_forward.1']
    #allocation5 [shape = 'u8[512]{0}', space=vmem, size = 0x400, scoped, tag = 'input window, operand 2, single buffered']
    #allocation6 [shape = 's32[1]{0}', space=sflag, size = 0x4, scoped, tag = 'scoped memory for actor_discrete_forward.1']
    #allocation7 [shape = 'u8[512]{0}', space=vmem, size = 0x400, scoped, tag = 'input window, operand 4, single buffered']
    #allocation8 [shape = 'u8[512]{0}', space=vmem, size = 0x400, scoped, tag = 'input window, operand 6, single buffered']
    #allocation9 [shape = 's32[1]{0}', space=sflag, size = 0x4, scoped, tag = 'scoped memory for actor_discrete_forward.1']
    %18 = vsyncpa [#allocation4], 0
    %19 = vsyncpa [#allocation6], 0
    %20 = vsyncpa [#allocation9], 0
    // Predicated region
    $region2: #{actor_discrete_forward.1} parent=1 // pred_check
      _
    $region3: #{actor_discrete_forward.1} parent=1 // pred_check_branch
      %22 = sbr.rel (0) target = $region5
    $region4: #{actor_discrete_forward.1} parent=1 // pred_region
      _
    $region5: #{actor_discrete_forward.1} parent=1 // pred_fallthru
      _
    // Predicated region
    $region6: #{actor_discrete_forward.1} parent=1 // pred_check
      _
    $region7: #{actor_discrete_forward.1} parent=1 // pred_check_branch
      %24 = sbr.rel (0) target = $region9
    $region8: #{actor_discrete_forward.1} parent=1 // pred_region
      %s26 = ssub.s32 384, 384
      %27 = vsyncadd [#allocation4], %s26
      %s28 = sshll.u32 [#allocation3], 4
      %s29 = int_to_ptr.vmem [resolvable:$true] %s28
      %34 = dma.hbm_to_vmem [thread:$0]  %s1, 384, %s29, [#allocation4], 128, 128, 8
    $region9: #{actor_discrete_forward.1} parent=1 // pred_fallthru
      _
    // Predicated region
    $region10: #{actor_discrete_forward.1} parent=1 // pred_check
      _
    $region11: #{actor_discrete_forward.1} parent=1 // pred_check_branch
      %36 = sbr.rel (0) target = $region13
    $region12: #{actor_discrete_forward.1} parent=1 // pred_region
      %s38 = ssub.s32 16, 16
      %39 = vsyncadd [#allocation6], %s38
      %s41 = sshll.u32 [#allocation5], 4
      %s42 = int_to_ptr.vmem [resolvable:$true] %s41
      %44 = dma.hbm_to_vmem [thread:$0]  %s2, 16, %s42, [#allocation6]
    $region13: #{actor_discrete_forward.1} parent=1 // pred_fallthru
      _
    // Predicated region
    $region14: #{actor_discrete_forward.1} parent=1 // pred_check
      _
    $region15: #{actor_discrete_forward.1} parent=1 // pred_check_branch
      %46 = sbr.rel (0) target = $region17
    $region16: #{actor_discrete_forward.1} parent=1 // pred_region
      _
    $region17: #{actor_discrete_forward.1} parent=1 // pred_fallthru
      _
    // Predicated region
    $region18: #{actor_discrete_forward.1} parent=1 // pred_check
      _
    $region19: #{actor_discrete_forward.1} parent=1 // pred_check_branch
      %48 = sbr.rel (0) target = $region21
    $region20: #{actor_discrete_forward.1} parent=1 // pred_region
      %s50 = ssub.s32 16, 16
      %51 = vsyncadd [#allocation6], %s50
      %s53 = sshll.u32 [#allocation7], 4
      %s54 = int_to_ptr.vmem [resolvable:$true] %s53
      %56 = dma.hbm_to_vmem [thread:$0]  %s4, 16, %s54, [#allocation6]
    $region21: #{actor_discrete_forward.1} parent=1 // pred_fallthru
      _
    // Predicated region
    $region22: #{actor_discrete_forward.1} parent=1 // pred_check
      _
    $region23: #{actor_discrete_forward.1} parent=1 // pred_check_branch
      %58 = sbr.rel (0) target = $region25
    $region24: #{actor_discrete_forward.1} parent=1 // pred_region
      _
    $region25: #{actor_discrete_forward.1} parent=1 // pred_fallthru
      _
    // Predicated region
    $region26: #{actor_discrete_forward.1} parent=1 // pred_check
      _
    $region27: #{actor_discrete_forward.1} parent=1 // pred_check_branch
      %60 = sbr.rel (0) target = $region29
    $region28: #{actor_discrete_forward.1} parent=1 // pred_region
      %s62 = ssub.s32 16, 16
      %63 = vsyncadd [#allocation9], %s62
      %s65 = sshll.u32 [#allocation8], 4
      %s66 = int_to_ptr.vmem [resolvable:$true] %s65
      %68 = dma.hbm_to_vmem [thread:$0]  %s6, 16, %s66, [#allocation9]
    $region29: #{actor_discrete_forward.1} parent=1 // pred_fallthru
      _
    // Predicated region
    $region30: #{actor_discrete_forward.1} parent=1 // pred_check
      _
    $region31: #{actor_discrete_forward.1} parent=1 // pred_check_branch
      %70 = sbr.rel (0) target = $region33
    $region32: #{actor_discrete_forward.1} parent=1 // pred_region
      _
    $region33: #{actor_discrete_forward.1} parent=1 // pred_fallthru
      _
    // Predicated region
    $region34: #{actor_discrete_forward.1} parent=1 // pred_check
      _
    $region35: #{actor_discrete_forward.1} parent=1 // pred_check_branch
      %72 = sbr.rel (0) target = $region37
    $region36: #{actor_discrete_forward.1} parent=1 // pred_region
      _
    $region37: #{actor_discrete_forward.1} parent=1 // pred_fallthru
      _
    // Predicated region
    $region38: #{actor_discrete_forward.1} parent=1 // pred_check
      _
    $region39: #{actor_discrete_forward.1} parent=1 // pred_check_branch
      %74 = sbr.rel (0) target = $region41
    $region40: #{actor_discrete_forward.1} parent=1 // pred_region
      _
    $region41: #{actor_discrete_forward.1} parent=1 // pred_fallthru
      _
    // Predicated region
    $region42: #{actor_discrete_forward.1} parent=1 // pred_check
      _
    $region43: #{actor_discrete_forward.1} parent=1 // pred_check_branch
      %76 = sbr.rel (0) target = $region45
    $region44: #{actor_discrete_forward.1} parent=1 // pred_region
      _
    $region45: #{actor_discrete_forward.1} parent=1 // pred_fallthru
      _
    // Predicated region
    $region46: #{actor_discrete_forward.1} parent=1 // pred_check
      _
    $region47: #{actor_discrete_forward.1} parent=1 // pred_check_branch
      %78 = sbr.rel (0) target = $region49
    $region48: #{actor_discrete_forward.1} parent=1 // pred_region
      %79 = dma.done [#allocation4], 384
    $region49: #{actor_discrete_forward.1} parent=1 // pred_fallthru
      _
    // Predicated region
    $region50: #{actor_discrete_forward.1} parent=1 // pred_check
      _
    $region51: #{actor_discrete_forward.1} parent=1 // pred_check_branch
      %81 = sbr.rel (0) target = $region53
    $region52: #{actor_discrete_forward.1} parent=1 // pred_region
      %82 = dma.done [#allocation6], 16
    $region53: #{actor_discrete_forward.1} parent=1 // pred_fallthru
      _
    // Predicated region
    $region54: #{actor_discrete_forward.1} parent=1 // pred_check
      _
    $region55: #{actor_discrete_forward.1} parent=1 // pred_check_branch
      %84 = sbr.rel (0) target = $region57
    $region56: #{actor_discrete_forward.1} parent=1 // pred_region
      %85 = dma.done [#allocation6], 16
    $region57: #{actor_discrete_forward.1} parent=1 // pred_fallthru
      _
    // Predicated region
    $region58: #{actor_discrete_forward.1} parent=1 // pred_check
      _
    $region59: #{actor_discrete_forward.1} parent=1 // pred_check_branch
      %87 = sbr.rel (0) target = $region61
    $region60: #{actor_discrete_forward.1} parent=1 // pred_region
      %88 = dma.done [#allocation9], 16
    $region61: #{actor_discrete_forward.1} parent=1 // pred_fallthru
      _
    %v89 = vld [vmem:[%s0] sm:$0xff]
    %v90 = vld [vmem:[%s0 + $0x8] sm:$0xff]
    %v91 = vld [vmem:[#allocation3] sm:$0xff]
    %v92 = vld [vmem:[#allocation3 + $0x8] sm:$0xff]
    %v93 = vld [vmem:[#allocation3 + $0x10] sm:$0xff]
    %v94 = vld [vmem:[#allocation5] sm:$0x1]
    %v96 = vlaneseq
    %v97 = vshrl.u32 %v96, 7
    %v98 = vsub.s32 0, %v97
    %v99 = vrot.slane %v94, %v98
    %vm101 = vcmask 195584
    %v103 = vsel %vm101, %v89, 0
    %v106 = vsel %vm101, %v90, 0
    %108 = vmatprep.subr.mxu0 0.0
    %109 = vmatpush1.msra.mxu0 0.0
    %110 = vmatprep.subr.mxu0 0.0
    %111 = vmatpush1.msra.mxu0 0.0
    %112 = vmatprep.subr.mxu0 0.0
    %113 = vmatpush1.msra.mxu0 0.0
    %114 = vmatprep.subr.mxu0 0.0
    %115 = vmatpush1.msra.mxu0 0.0
    %116 = vmatprep.subr.mxu0 0.0
    %117 = vmatpush1.msra.mxu0 0.0
    %118 = vmatprep.subr.mxu0 0.0
    %119 = vmatpush1.msra.mxu0 0.0
    %120 = vmatprep.subr.mxu0 0.0
    %121 = vmatpush1.msra.mxu0 0.0
    %122 = vmatprep.subr.mxu0 0.0
    %123 = vmatpush1.msra.mxu0 0.0
    %124 = vmatprep.subr.mxu0 0.0
    %125 = vmatpush1.msra.mxu0 0.0
    %126 = vmatprep.subr.mxu0 0.0
    %127 = vmatpush1.msra.mxu0 0.0
    %128 = vmatprep.subr.mxu0 0.0
    %129 = vmatpush1.msra.mxu0 0.0
    %130 = vmatprep.subr.mxu0 0.0
    %131 = vmatpush1.msra.mxu0 0.0
    %132 = vmatprep.subr.mxu0 0.0
    %133 = vmatpush1.msra.mxu0 0.0
    %134 = vmatprep.subr.mxu0 0.0
    %135 = vmatpush1.msra.mxu0 %v93
    %136 = vmatprep.subr.mxu0 0.0
    %137 = vmatpush1.msra.mxu0 %v92
    %138 = vmatprep.subr.mxu0 0.0
    %139 = vmatpush1.msra.mxu0 %v91
    %140 = vmatprep.subr.mxu0 0.0
    %141 = vmatpush2.msra.mxu0 0.0
    %142 = vmatprep.subr.mxu0 0.0
    %143 = vmatpush2.msra.mxu0 0.0
    %144 = vmatprep.subr.mxu0 0.0
    %145 = vmatpush2.msra.mxu0 0.0
    %146 = vmatprep.subr.mxu0 0.0
    %147 = vmatpush2.msra.mxu0 0.0
    %148 = vmatprep.subr.mxu0 0.0
    %149 = vmatpush2.msra.mxu0 0.0
    %150 = vmatprep.subr.mxu0 0.0
    %151 = vmatpush2.msra.mxu0 0.0
    %152 = vmatprep.subr.mxu0 0.0
    %153 = vmatpush2.msra.mxu0 0.0
    %154 = vmatprep.subr.mxu0 0.0
    %155 = vmatpush2.msra.mxu0 0.0
    %156 = vmatprep.subr.mxu0 0.0
    %157 = vmatpush2.msra.mxu0 0.0
    %158 = vmatprep.subr.mxu0 0.0
    %159 = vmatpush2.msra.mxu0 0.0
    %160 = vmatprep.subr.mxu0 0.0
    %161 = vmatpush2.msra.mxu0 0.0
    %162 = vmatprep.subr.mxu0 0.0
    %163 = vmatpush2.msra.mxu0 0.0
    %164 = vmatprep.subr.mxu0 0.0
    %165 = vmatpush2.msra.mxu0 0.0
    %166 = vmatprep.subr.mxu0 0.0
    %167 = vmatpush2.msra.mxu0 0.0
    %168 = vmatprep.subr.mxu0 0.0
    %169 = vmatpush2.msra.mxu0 0.0
    %170 = vmatprep.subr.mxu0 0.0
    %171 = vmatpush2.msra.mxu0 0.0
    %172 = vmatprep.mubr.f32.mxu0 0.0
    %173 = vmatmul.mubr.f32.gmra.mxu0 %v103
    %v174 = vpop.f32.mrf.mxu0
    %v175 = vadd.f32 %v99, %v174
    %v176 = vpop.f32.mrf.mxu0
    %177 = vmatprep.mubr.f32.mxu0 0.0
    %178 = vmatmul.mubr.f32.gmra.mxu0 %v106
    %v179 = vpop.f32.mrf.mxu0
    %v180 = vadd.f32 %v99, %v179
    %v181 = vpop.f32.mrf.mxu0
    %182 = vdwg.mxu0
    %v183 = vmax.f32 %v175, 0.0
    %v184 = vmax.f32 %v180, 0.0
    %v185 = vld [vmem:[%s3] sm:$0xff]
    %v186 = vld [vmem:[%s3 + $0x8] sm:$0xff]
    %v187 = vld [vmem:[%s3 + $0x10] sm:$0xff]
    %v188 = vld [vmem:[%s3 + $0x18] sm:$0xff]
    %v189 = vld [vmem:[#allocation7] sm:$0x1]
    %v191 = vlaneseq
    %v192 = vshrl.u32 %v191, 7
    %v193 = vsub.s32 0, %v192
    %v194 = vrot.slane %v189, %v193
    %vm196 = vcmask 261120
    %v198 = vsel %vm196, %v183, 0
    %v201 = vsel %vm196, %v184, 0
    %203 = vmatprep.subr.mxu0 0.0
    %204 = vmatpush1.msra.mxu0 0.0
    %205 = vmatprep.subr.mxu0 0.0
    %206 = vmatpush1.msra.mxu0 0.0
    %207 = vmatprep.subr.mxu0 0.0
    %208 = vmatpush1.msra.mxu0 0.0
    %209 = vmatprep.subr.mxu0 0.0
    %210 = vmatpush1.msra.mxu0 0.0
    %211 = vmatprep.subr.mxu0 0.0
    %212 = vmatpush1.msra.mxu0 0.0
    %213 = vmatprep.subr.mxu0 0.0
    %214 = vmatpush1.msra.mxu0 0.0
    %215 = vmatprep.subr.mxu0 0.0
    %216 = vmatpush1.msra.mxu0 0.0
    %217 = vmatprep.subr.mxu0 0.0
    %218 = vmatpush1.msra.mxu0 0.0
    %219 = vmatprep.subr.mxu0 0.0
    %220 = vmatpush1.msra.mxu0 0.0
    %221 = vmatprep.subr.mxu0 0.0
    %222 = vmatpush1.msra.mxu0 0.0
    %223 = vmatprep.subr.mxu0 0.0
    %224 = vmatpush1.msra.mxu0 0.0
    %225 = vmatprep.subr.mxu0 0.0
    %226 = vmatpush1.msra.mxu0 0.0
    %227 = vmatprep.subr.mxu0 0.0
    %228 = vmatpush1.msra.mxu0 %v188
    %229 = vmatprep.subr.mxu0 0.0
    %230 = vmatpush1.msra.mxu0 %v187
    %231 = vmatprep.subr.mxu0 0.0
    %232 = vmatpush1.msra.mxu0 %v186
    %233 = vmatprep.subr.mxu0 0.0
    %234 = vmatpush1.msra.mxu0 %v185
    %235 = vmatprep.subr.mxu0 0.0
    %236 = vmatpush2.msra.mxu0 0.0
    %237 = vmatprep.subr.mxu0 0.0
    %238 = vmatpush2.msra.mxu0 0.0
    %239 = vmatprep.subr.mxu0 0.0
    %240 = vmatpush2.msra.mxu0 0.0
    %241 = vmatprep.subr.mxu0 0.0
    %242 = vmatpush2.msra.mxu0 0.0
    %243 = vmatprep.subr.mxu0 0.0
    %244 = vmatpush2.msra.mxu0 0.0
    %245 = vmatprep.subr.mxu0 0.0
    %246 = vmatpush2.msra.mxu0 0.0
    %247 = vmatprep.subr.mxu0 0.0
    %248 = vmatpush2.msra.mxu0 0.0
    %249 = vmatprep.subr.mxu0 0.0
    %250 = vmatpush2.msra.mxu0 0.0
    %251 = vmatprep.subr.mxu0 0.0
    %252 = vmatpush2.msra.mxu0 0.0
    %253 = vmatprep.subr.mxu0 0.0
    %254 = vmatpush2.msra.mxu0 0.0
    %255 = vmatprep.subr.mxu0 0.0
    %256 = vmatpush2.msra.mxu0 0.0
    %257 = vmatprep.subr.mxu0 0.0
    %258 = vmatpush2.msra.mxu0 0.0
    %259 = vmatprep.subr.mxu0 0.0
    %260 = vmatpush2.msra.mxu0 0.0
    %261 = vmatprep.subr.mxu0 0.0
    %262 = vmatpush2.msra.mxu0 0.0
    %263 = vmatprep.subr.mxu0 0.0
    %264 = vmatpush2.msra.mxu0 0.0
    %265 = vmatprep.subr.mxu0 0.0
    %266 = vmatpush2.msra.mxu0 0.0
    %267 = vmatprep.mubr.f32.mxu0 0.0
    %268 = vmatmul.mubr.f32.gmra.mxu0 %v198
    %v269 = vpop.f32.mrf.mxu0
    %v270 = vadd.f32 %v194, %v269
    %v271 = vpop.f32.mrf.mxu0
    %272 = vmatprep.mubr.f32.mxu0 0.0
    %273 = vmatmul.mubr.f32.gmra.mxu0 %v201
    %v274 = vpop.f32.mrf.mxu0
    %v275 = vadd.f32 %v194, %v274
    %v276 = vpop.f32.mrf.mxu0
    %277 = vdwg.mxu0
    %v278 = vmax.f32 %v270, 0.0
    %v279 = vmax.f32 %v275, 0.0
    %v280 = vld [vmem:[%s5] sm:$0xff]
    %v281 = vld [vmem:[%s5 + $0x8] sm:$0xff]
    %v282 = vld [vmem:[%s5 + $0x10] sm:$0xff]
    %v283 = vld [vmem:[%s5 + $0x18] sm:$0xff]
    %v284 = vld [vmem:[#allocation8] sm:$0x1]
    %v286 = vlaneseq
    %v287 = vshrl.u32 %v286, 7
    %v288 = vsub.s32 0, %v287
    %v289 = vrot.slane %v284, %v288
    %v292 = vsel %vm196, %v278, 0
    %v295 = vsel %vm196, %v279, 0
    %297 = vmatprep.subr.mxu0 0.0
    %298 = vmatpush1.msra.mxu0 0.0
    %299 = vmatprep.subr.mxu0 0.0
    %300 = vmatpush1.msra.mxu0 0.0
    %301 = vmatprep.subr.mxu0 0.0
    %302 = vmatpush1.msra.mxu0 0.0
    %303 = vmatprep.subr.mxu0 0.0
    %304 = vmatpush1.msra.mxu0 0.0
    %305 = vmatprep.subr.mxu0 0.0
    %306 = vmatpush1.msra.mxu0 0.0
    %307 = vmatprep.subr.mxu0 0.0
    %308 = vmatpush1.msra.mxu0 0.0
    %309 = vmatprep.subr.mxu0 0.0
    %310 = vmatpush1.msra.mxu0 0.0
    %311 = vmatprep.subr.mxu0 0.0
    %312 = vmatpush1.msra.mxu0 0.0
    %313 = vmatprep.subr.mxu0 0.0
    %314 = vmatpush1.msra.mxu0 0.0
    %315 = vmatprep.subr.mxu0 0.0
    %316 = vmatpush1.msra.mxu0 0.0
    %317 = vmatprep.subr.mxu0 0.0
    %318 = vmatpush1.msra.mxu0 0.0
    %319 = vmatprep.subr.mxu0 0.0
    %320 = vmatpush1.msra.mxu0 0.0
    %321 = vmatprep.subr.mxu0 0.0
    %322 = vmatpush1.msra.mxu0 %v283
    %323 = vmatprep.subr.mxu0 0.0
    %324 = vmatpush1.msra.mxu0 %v282
    %325 = vmatprep.subr.mxu0 0.0
    %326 = vmatpush1.msra.mxu0 %v281
    %327 = vmatprep.subr.mxu0 0.0
    %328 = vmatpush1.msra.mxu0 %v280
    %329 = vmatprep.subr.mxu0 0.0
    %330 = vmatpush2.msra.mxu0 0.0
    %331 = vmatprep.subr.mxu0 0.0
    %332 = vmatpush2.msra.mxu0 0.0
    %333 = vmatprep.subr.mxu0 0.0
    %334 = vmatpush2.msra.mxu0 0.0
    %335 = vmatprep.subr.mxu0 0.0
    %336 = vmatpush2.msra.mxu0 0.0
    %337 = vmatprep.subr.mxu0 0.0
    %338 = vmatpush2.msra.mxu0 0.0
    %339 = vmatprep.subr.mxu0 0.0
    %340 = vmatpush2.msra.mxu0 0.0
    %341 = vmatprep.subr.mxu0 0.0
    %342 = vmatpush2.msra.mxu0 0.0
    %343 = vmatprep.subr.mxu0 0.0
    %344 = vmatpush2.msra.mxu0 0.0
    %345 = vmatprep.subr.mxu0 0.0
    %346 = vmatpush2.msra.mxu0 0.0
    %347 = vmatprep.subr.mxu0 0.0
    %348 = vmatpush2.msra.mxu0 0.0
    %349 = vmatprep.subr.mxu0 0.0
    %350 = vmatpush2.msra.mxu0 0.0
    %351 = vmatprep.subr.mxu0 0.0
    %352 = vmatpush2.msra.mxu0 0.0
    %353 = vmatprep.subr.mxu0 0.0
    %354 = vmatpush2.msra.mxu0 0.0
    %355 = vmatprep.subr.mxu0 0.0
    %356 = vmatpush2.msra.mxu0 0.0
    %357 = vmatprep.subr.mxu0 0.0
    %358 = vmatpush2.msra.mxu0 0.0
    %359 = vmatprep.subr.mxu0 0.0
    %360 = vmatpush2.msra.mxu0 0.0
    %361 = vmatprep.mubr.f32.mxu0 0.0
    %362 = vmatmul.mubr.f32.gmra.mxu0 %v292
    %v363 = vpop.f32.mrf.mxu0
    %v364 = vadd.f32 %v289, %v363
    %v365 = vpop.f32.mrf.mxu0
    %366 = vmatprep.mubr.f32.mxu0 0.0
    %367 = vmatmul.mubr.f32.gmra.mxu0 %v295
    %v368 = vpop.f32.mrf.mxu0
    %v369 = vadd.f32 %v289, %v368
    %v370 = vpop.f32.mrf.mxu0
    %371 = vdwg.mxu0
    %v372 = vmax.f32 %v364, 0.0
    %v373 = vmax.f32 %v369, 0.0
    %v374 = vld [vmem:[%s7] sm:$0xff]
    %v375 = vld [vmem:[%s7 + $0x8] sm:$0xff]
    %v376 = vld [vmem:[%s7 + $0x10] sm:$0xff]
    %v377 = vld [vmem:[%s7 + $0x18] sm:$0xff]
    %v378 = vld [vmem:[%s8] sm:$0x3]
    %v380 = vlaneseq
    %v381 = vshrl.u32 %v380, 7
    %v382 = vsub.s32 0, %v381
    %v383 = vrot.slane %v378, %v382
    %v384 = vlaneseq
    %v385 = vshrl.u32 %v384, 7
    %v386 = vsub.s32 1, %v385
    %v387 = vrot.slane %v378, %v386
    %vm390 = vcmask 130048
    %v392 = vsel %vm390, %v372, 0
    %v395 = vsel %vm390, %v373, 0
    %397 = vmatprep.subr.mxu0 0.0
    %398 = vmatpush1.msra.mxu0 0.0
    %399 = vmatprep.subr.mxu0 0.0
    %400 = vmatpush1.msra.mxu0 0.0
    %401 = vmatprep.subr.mxu0 0.0
    %402 = vmatpush1.msra.mxu0 0.0
    %403 = vmatprep.subr.mxu0 0.0
    %404 = vmatpush1.msra.mxu0 0.0
    %405 = vmatprep.subr.mxu0 0.0
    %406 = vmatpush1.msra.mxu0 0.0
    %407 = vmatprep.subr.mxu0 0.0
    %408 = vmatpush1.msra.mxu0 0.0
    %409 = vmatprep.subr.mxu0 0.0
    %410 = vmatpush1.msra.mxu0 0.0
    %411 = vmatprep.subr.mxu0 0.0
    %412 = vmatpush1.msra.mxu0 0.0
    %413 = vmatprep.subr.mxu0 0.0
    %414 = vmatpush1.msra.mxu0 0.0
    %415 = vmatprep.subr.mxu0 0.0
    %416 = vmatpush1.msra.mxu0 0.0
    %417 = vmatprep.subr.mxu0 0.0
    %418 = vmatpush1.msra.mxu0 0.0
    %419 = vmatprep.subr.mxu0 0.0
    %420 = vmatpush1.msra.mxu0 0.0
    %421 = vmatprep.subr.mxu0 0.0
    %422 = vmatpush1.msra.mxu0 0.0
    %423 = vmatprep.subr.mxu0 0.0
    %424 = vmatpush1.msra.mxu0 0.0
    %425 = vmatprep.subr.mxu0 %v377
    %426 = vmatpush1.msra.mxu0 %v376
    %427 = vmatprep.subr.mxu0 %v375
    %428 = vmatpush1.msra.mxu0 %v374
    %429 = vmatprep.subr.mxu0 0.0
    %430 = vmatpush2.msra.mxu0 0.0
    %431 = vmatprep.subr.mxu0 0.0
    %432 = vmatpush2.msra.mxu0 0.0
    %433 = vmatprep.subr.mxu0 0.0
    %434 = vmatpush2.msra.mxu0 0.0
    %435 = vmatprep.subr.mxu0 0.0
    %436 = vmatpush2.msra.mxu0 0.0
    %437 = vmatprep.subr.mxu0 0.0
    %438 = vmatpush2.msra.mxu0 0.0
    %439 = vmatprep.subr.mxu0 0.0
    %440 = vmatpush2.msra.mxu0 0.0
    %441 = vmatprep.subr.mxu0 0.0
    %442 = vmatpush2.msra.mxu0 0.0
    %443 = vmatprep.subr.mxu0 0.0
    %444 = vmatpush2.msra.mxu0 0.0
    %445 = vmatprep.subr.mxu0 0.0
    %446 = vmatpush2.msra.mxu0 0.0
    %447 = vmatprep.subr.mxu0 0.0
    %448 = vmatpush2.msra.mxu0 0.0
    %449 = vmatprep.subr.mxu0 0.0
    %450 = vmatpush2.msra.mxu0 0.0
    %451 = vmatprep.subr.mxu0 0.0
    %452 = vmatpush2.msra.mxu0 0.0
    %453 = vmatprep.subr.mxu0 0.0
    %454 = vmatpush2.msra.mxu0 0.0
    %455 = vmatprep.subr.mxu0 0.0
    %456 = vmatpush2.msra.mxu0 0.0
    %457 = vmatprep.subr.mxu0 0.0
    %458 = vmatpush2.msra.mxu0 0.0
    %459 = vmatprep.subr.mxu0 0.0
    %460 = vmatpush2.msra.mxu0 0.0
    %461 = vmatprep.mubr.f32.mxu0 0.0
    %462 = vmatmul.mubr.f32.gmra.mxu0 %v392
    %v463 = vpop.f32.mrf.mxu0
    %v464 = vadd.f32 %v383, %v463
    %v465 = vpop.f32.mrf.mxu0
    %v466 = vadd.f32 %v387, %v465
    %467 = vmatprep.mubr.f32.mxu0 0.0
    %468 = vmatmul.mubr.f32.gmra.mxu0 %v395
    %v469 = vpop.f32.mrf.mxu0
    %v470 = vadd.f32 %v383, %v469
    %v471 = vpop.f32.mrf.mxu0
    %v472 = vadd.f32 %v387, %v471
    %473 = vdwg.mxu0
    %v474 = vmax.f32 %v464, 0.0
    %v475 = vmax.f32 %v466, 0.0
    %v476 = vmax.f32 %v470, 0.0
    %v477 = vmax.f32 %v472, 0.0
    %v478 = vld [vmem:[%s9] sm:$0x3]
    %v479 = vld [vmem:[#allocation2] sm:$0x1]
    %481 = vset.pattern.permute.xlu0 0
    %482 = vperm.xlu0 %481, %v479
    %v483 = vpop.permute.xlu0 %482
    %v485 = vlaneseq
    %v486 = vshrl.u32 %v485, 7
    %v487 = vsub.s32 0, %v486
    %v488 = vrot.slane %v483, %v487
    %v490 = vlaneseq
    %v491 = vshrl.u32 %v490, 7
    %v492 = vsub.s32 0, %v491
    %v493 = vrot.slane %v478, %v492
    %v494 = vlaneseq
    %v495 = vshrl.u32 %v494, 7
    %v496 = vsub.s32 1, %v495
    %v497 = vrot.slane %v478, %v496
    %500 = vmatprep.subr.mxu0 0.0
    %501 = vmatpush1.xpose.msra.mxu0 0.0
    %502 = vmatprep.subr.mxu0 0.0
    %503 = vmatpush1.xpose.msra.mxu0 0.0
    %504 = vmatprep.subr.mxu0 0.0
    %505 = vmatpush1.xpose.msra.mxu0 0.0
    %506 = vmatprep.subr.mxu0 0.0
    %507 = vmatpush1.xpose.msra.mxu0 0.0
    %508 = vmatprep.subr.mxu0 0.0
    %509 = vmatpush1.xpose.msra.mxu0 0.0
    %510 = vmatprep.subr.mxu0 0.0
    %511 = vmatpush1.xpose.msra.mxu0 0.0
    %512 = vmatprep.subr.mxu0 0.0
    %513 = vmatpush1.xpose.msra.mxu0 0.0
    %514 = vmatprep.subr.mxu0 0.0
    %515 = vmatpush1.xpose.msra.mxu0 0.0
    %516 = vmatprep.subr.mxu0 0.0
    %517 = vmatpush1.xpose.msra.mxu0 0.0
    %518 = vmatprep.subr.mxu0 0.0
    %519 = vmatpush1.xpose.msra.mxu0 0.0
    %520 = vmatprep.subr.mxu0 0.0
    %521 = vmatpush1.xpose.msra.mxu0 0.0
    %522 = vmatprep.subr.mxu0 0.0
    %523 = vmatpush1.xpose.msra.mxu0 0.0
    %524 = vmatprep.subr.mxu0 0.0
    %525 = vmatpush1.xpose.msra.mxu0 0.0
    %526 = vmatprep.subr.mxu0 0.0
    %527 = vmatpush1.xpose.msra.mxu0 0.0
    %528 = vmatprep.subr.mxu0 %v477
    %529 = vmatpush1.xpose.msra.mxu0 %v476
    %530 = vmatprep.subr.mxu0 %v475
    %531 = vmatpush1.xpose.msra.mxu0 %v474
    %532 = vmatprep.subr.mxu0 0.0
    %533 = vmatpush2.xpose.msra.mxu0 0.0
    %534 = vmatprep.subr.mxu0 0.0
    %535 = vmatpush2.xpose.msra.mxu0 0.0
    %536 = vmatprep.subr.mxu0 0.0
    %537 = vmatpush2.xpose.msra.mxu0 0.0
    %538 = vmatprep.subr.mxu0 0.0
    %539 = vmatpush2.xpose.msra.mxu0 0.0
    %540 = vmatprep.subr.mxu0 0.0
    %541 = vmatpush2.xpose.msra.mxu0 0.0
    %542 = vmatprep.subr.mxu0 0.0
    %543 = vmatpush2.xpose.msra.mxu0 0.0
    %544 = vmatprep.subr.mxu0 0.0
    %545 = vmatpush2.xpose.msra.mxu0 0.0
    %546 = vmatprep.subr.mxu0 0.0
    %547 = vmatpush2.xpose.msra.mxu0 0.0
    %548 = vmatprep.subr.mxu0 0.0
    %549 = vmatpush2.xpose.msra.mxu0 0.0
    %550 = vmatprep.subr.mxu0 0.0
    %551 = vmatpush2.xpose.msra.mxu0 0.0
    %552 = vmatprep.subr.mxu0 0.0
    %553 = vmatpush2.xpose.msra.mxu0 0.0
    %554 = vmatprep.subr.mxu0 0.0
    %555 = vmatpush2.xpose.msra.mxu0 0.0
    %556 = vmatprep.subr.mxu0 0.0
    %557 = vmatpush2.xpose.msra.mxu0 0.0
    %558 = vmatprep.subr.mxu0 0.0
    %559 = vmatpush2.xpose.msra.mxu0 0.0
    %560 = vmatprep.subr.mxu0 0.0
    %561 = vmatpush2.xpose.msra.mxu0 0.0
    %562 = vmatprep.subr.mxu0 0.0
    %563 = vmatpush2.xpose.msra.mxu0 0.0
    %564 = vmatprep.mubr.f32.mxu0 %v497
    %565 = vmatmul.mubr.f32.gmra.mxu0 %v493
    %v566 = vpop.f32.mrf.mxu0
    %v567 = vadd.f32 %v488, %v566
    %v568 = vpop.f32.mrf.mxu0
    %569 = vdwg.mxu0
    %v570 = vand.u32 2147483647, %v567
    %v571 = vsub.f32 0.0, %v570
    %v572 = vmul.f32 %v571, 1.442695
    %v573 = vpow.pop %v572
    %v574 = vadd.f32 %v573, 1.0
    %v575 = vrcp.pop %v574
    %v576 = vmul.f32 1.0, %v575
    %v577 = vmul.f32 %v573, %v576
    %vm578 = vcmp.ge.f32.partialorder %v567, 0.0
    %v579 = vsel %vm578, %v576, %v577
    %v580 = vsel %vm578, %v577, %v576
    %vm581 = vcmask 122880
    %582 = vst.msk [vmem:[%s11] sm:$0x1] %vm581, %v580
    %583 = vst.msk [vmem:[%s11 + $0x1] sm:$0x1] %vm581, %v579
    // Predicated region
    $region62: #{actor_discrete_forward.1} parent=1 // pred_check
      _
    $region63: #{actor_discrete_forward.1} parent=1 // pred_check_branch
      %585 = sbr.rel (0) target = $region65
    $region64: #{actor_discrete_forward.1} parent=1 // pred_region
      _
    $region65: #{actor_discrete_forward.1} parent=1 // pred_fallthru
      _
    // Predicated region
    $region66: #{actor_discrete_forward.1} parent=1 // pred_check
      _
    $region67: #{actor_discrete_forward.1} parent=1 // pred_check_branch
      %587 = sbr.rel (0) target = $region69
    $region68: #{actor_discrete_forward.1} parent=1 // pred_region
      _
    $region69: #{actor_discrete_forward.1} parent=1 // pred_fallthru
      _
    %588 = vsyncpa [#allocation4], 1
    %589 = vsyncpa [#allocation6], 1
    %590 = vsyncpa [#allocation9], 1

</llo_original>
